<compile_context>
chip_gen: v6e
topology: v6e:2x2x1
jax: 0.10.0
libtpu: 0.0.40
codegen_flags: <defaults>
</compile_context>

<pallas_src>
import functools

import jax
import jax.numpy as jnp
from jax import lax
from jax.experimental import pallas as pl
from jax.experimental.pallas import tpu as pltpu

_NEG_BIG = -1e30  # finite "minus infinity" (avoids inf-inf NaN corners)


def _round_up(x, m):
    return ((x + m - 1) // m) * m


def _vmem_budget_bytes():
    """Usable VMEM budget for this kernel (generation-aware, conservative fallback)."""
    cap = 64 * 1024 * 1024  # safe default (covers v7x's 64 MiB per-TC VMEM)
    try:
        info = pltpu.get_tpu_info()
        cap = int(getattr(info, "vmem_capacity_bytes", cap))
    except Exception:
        pass
    return max(16 << 20, min(int(cap * 0.7), 100 << 20))


def _estimate_vmem_bytes(tm, tn, d_pad, itemsize):
    inputs = 2 * (tm + tn) * d_pad * itemsize  # double-buffered row / col tiles
    temps = 5 * tm * tn * 4                    # live (tm, tn) f32 / mask temporaries
    small = 16 * tm * 4                        # scratch accumulators + out block
    return inputs + temps + small


def _pick_tiling(n, d_pad, itemsize, budget):
    """Return (tm, tn, n_pad) fitting `budget` bytes of VMEM."""
    n128 = _round_up(n, 128)

    # 1) Resident-column fast path: the whole padded contrast matrix is the column
    #    operand -> one column step, no HBM re-reads of `feat`.
    tn = n128
    cands = [t for t in (512, 256, 128, 64, 32, 16, 8) if n128 % t == 0]
    ok = [t for t in cands if _estimate_vmem_bytes(t, tn, d_pad, itemsize) <= budget]
    if ok:
        tm = ok[0]
        # Prefer >= 2 row tiles so both v7x TensorCores get work on the parallel axis.
        two_tile = [t for t in ok if t <= n128 // 2]
        if two_tile:
            tm = two_tile[0]
        return tm, tn, n128

    # 2) Tiled-column path for large N / large D (tm always divides tn).
    for tm, tn in ((512, 1024), (512, 512), (256, 512), (256, 256),
                   (128, 256), (128, 128)):
        if _estimate_vmem_bytes(tm, tn, d_pad, itemsize) <= budget:
            return tm, tn, _round_up(n, tn)
    return 128, 128, _round_up(n, 128)


def _supcon_kernel(row_ref, col_ref, out_ref, m_sc, l_sc, s_sc, *,
                   inv_temp, loss_scale, n_valid, n_views, bsz, col_padded):
    r = pl.program_id(0)
    c = pl.program_id(1)
    tm = row_ref.shape[0]
    tn = col_ref.shape[0]

    @pl.when(c == 0)
    def _init():
        m_sc[...] = jnp.full_like(m_sc, _NEG_BIG)
        l_sc[...] = jnp.zeros_like(l_sc)
        s_sc[...] = jnp.zeros_like(s_sc)

    # anchor_dot_contrast tile: contract both operands on dim 1 (no transpose),
    # MXU in the features' native dtype, f32 accumulation.  1/temperature is
    # applied to the f32 result (safe for bf16 feed).
    adc = lax.dot_general(
        row_ref[...], col_ref[...],
        dimension_numbers=(((1,), (1,)), ((), ())),
        preferred_element_type=jnp.float32,
    ) * jnp.float32(inv_temp)                              # (tm, tn) f32

    # In-kernel masks (no [N, N] mask DMA, no sample-id inputs).
    row_ids = r * tm + lax.broadcasted_iota(jnp.int32, (tm, 1), 0)   # (tm, 1)
    col_ids = c * tn + lax.broadcasted_iota(jnp.int32, (1, tn), 1)   # (1, tn)
    not_self = row_ids != col_ids
    if col_padded:
        logits_mask = jnp.logical_and(not_self, col_ids < n_valid)
    else:
        logits_mask = not_self
    same_sample = (row_ids % bsz) == (col_ids % bsz)       # broadcast -> (tm, tn)
    pos_mask = jnp.logical_and(logits_mask, same_sample)

    # Online log-sum-exp over off-diagonal, valid columns (the max shift cancels in
    # the final log-prob exactly as in the PyTorch reference).
    masked_logits = jnp.where(logits_mask, adc, _NEG_BIG)
    m_prev = m_sc[...]
    m_new = jnp.maximum(m_prev, jnp.max(masked_logits, axis=1, keepdims=True))
    alpha = jnp.exp(m_prev - m_new)
    p = jnp.exp(masked_logits - m_new)                     # masked entries underflow to 0
    l_sc[...] = alpha * l_sc[...] + jnp.sum(p, axis=1, keepdims=True)
    s_sc[...] = s_sc[...] + jnp.sum(jnp.where(pos_mask, adc, 0.0),
                                    axis=1, keepdims=True)
    m_sc[...] = m_new

    @pl.when(c == pl.num_programs(1) - 1)
    def _finalize():
        lse = m_sc[...] + jnp.log(l_sc[...])
        # Exactly n_views - 1 positives per valid anchor -> compile-time constant.
        mean_log_prob_pos = s_sc[...] * jnp.float32(1.0 / (n_views - 1)) - lse
        loss_rows = jnp.float32(loss_scale) * mean_log_prob_pos
        valid_row = row_ids < n_valid
        out_ref[...] = jnp.where(valid_row, loss_rows, 0.0)


def supcon_loss(features, temperature=0.07, base_temperature=0.07,
                compute_dtype=jnp.bfloat16):
    """SimCLR-mode SupConLoss (labels=None, mask=None, contrast_mode='all')."""
    if features.ndim < 3:
        raise ValueError("`features` needs to be [bsz, n_views, ...]")
    if features.ndim > 3:
        features = features.reshape(features.shape[0], features.shape[1], -1)

    bsz, n_views, dim = features.shape
    if n_views < 2:
        # The original PyTorch module divides by zero (NaN) in this case.
        raise ValueError("SupConLoss (SimCLR path) requires n_views >= 2")
    n = n_views * bsz

    # torch.cat(torch.unbind(features, dim=1), dim=0): view-major stacking.
    contrast_feature = jnp.transpose(features, (1, 0, 2)).reshape(n, dim)

    dtype = (jnp.dtype(compute_dtype) if compute_dtype is not None
             else jnp.dtype(contrast_feature.dtype))
    itemsize = dtype.itemsize
    d_pad = _round_up(dim, 128)

    budget = _vmem_budget_bytes()
    tm, tn, n_pad = _pick_tiling(n, d_pad, itemsize, budget)
    vmem_limit = int(min(budget, _estimate_vmem_bytes(tm, tn, d_pad, itemsize)
                         + (8 << 20)))

    # Zero-pad rows (excluded via mask / divisor) and the feature dim (zeros don't
    # change A @ A.T); cast to the MXU feed dtype (f32 accumulation in-kernel).
    feat = jnp.pad(contrast_feature.astype(dtype),
                   ((0, n_pad - n), (0, d_pad - dim)))

    kernel = functools.partial(
        _supcon_kernel,
        inv_temp=1.0 / float(temperature),
        loss_scale=-(float(temperature) / float(base_temperature)),
        n_valid=n,
        n_views=n_views,
        bsz=bsz,
        col_padded=(n_pad != n),
    )

    grid = (n_pad // tm, n_pad // tn)
    per_row = pl.pallas_call(
        kernel,
        out_shape=jax.ShapeDtypeStruct((n_pad, 1), jnp.float32),
        grid_spec=pltpu.PrefetchScalarGridSpec(
            num_scalar_prefetch=0,
            grid=grid,
            in_specs=[
                pl.BlockSpec((tm, d_pad), lambda r, c: (r, 0)),  # anchor rows
                pl.BlockSpec((tn, d_pad), lambda r, c: (c, 0)),  # contrast cols
            ],
            out_specs=pl.BlockSpec((tm, 1), lambda r, c: (r, 0)),
            scratch_shapes=[
                pltpu.VMEM((tm, 1), jnp.float32),  # running max
                pltpu.VMEM((tm, 1), jnp.float32),  # running sum-exp
                pltpu.VMEM((tm, 1), jnp.float32),  # running sum(pos * logits)
            ],
        ),
        compiler_params=pltpu.CompilerParams(
            dimension_semantics=("parallel", "arbitrary"),
            vmem_limit_bytes=vmem_limit),
    )(feat, feat)

    # loss.view(anchor_count, batch_size).mean() == mean over all N valid anchors.
    return jnp.sum(per_row) / n


def _supcon_loss_ref(features, temperature=0.07, base_temperature=0.07):
    """Pure-JAX reference mirroring the PyTorch code (labels=None, mask=None, 'all')."""
    bsz, n_views, dim = features.shape
    n = n_views * bsz
    cf = jnp.transpose(features, (1, 0, 2)).reshape(n, dim).astype(jnp.float32)
    mask = jnp.tile(jnp.eye(bsz, dtype=jnp.float32), (n_views, n_views))
    adc = (cf @ cf.T) / temperature
    logits = adc - jnp.max(adc, axis=1, keepdims=True)
    logits_mask = 1.0 - jnp.eye(n, dtype=jnp.float32)
    mask = mask * logits_mask
    exp_logits = jnp.exp(logits) * logits_mask
    log_prob = logits - jnp.log(jnp.sum(exp_logits, axis=1, keepdims=True))
    mean_log_prob_pos = jnp.sum(mask * log_prob, axis=1) / jnp.sum(mask, axis=1)
    return jnp.mean(-(temperature / base_temperature) * mean_log_prob_pos)


if __name__ == "__main__":
    key = jax.random.PRNGKey(0)
    bsz, n_views, dim = 4, 2, 32
    # L2-normalized features, as is conventional for this loss.
    feats = jax.random.normal(key, (bsz, n_views, dim), dtype=jnp.float32)
    feats = feats / jnp.linalg.norm(feats, axis=-1, keepdims=True)

    ref_f32 = _supcon_loss_ref(feats)

    # Exact-precision path (f32 MXU feed).
    loss_f32 = jax.block_until_ready(supcon_loss(feats, compute_dtype=jnp.float32))
    assert jnp.allclose(loss_f32, ref_f32, rtol=1e-4, atol=1e-4), (loss_f32, ref_f32)

    # Default fast path (bf16 MXU feed, f32 accumulation & post-matmul math);
    # compare against the reference evaluated on bf16-rounded inputs.
    ref_bf16 = _supcon_loss_ref(feats.astype(jnp.bfloat16).astype(jnp.float32))
    loss_bf16 = jax.block_until_ready(supcon_loss(feats))
    assert jnp.allclose(loss_bf16, ref_bf16, rtol=1e-3, atol=2e-3), (loss_bf16, ref_bf16)

    print("KERNEL_OK")
</pallas_src>

<mosaic_0001>
module attributes {stable_mosaic.version = 11 : i64} {
  func.func @_supcon_kernel(%arg0: i32, %arg1: i32, %arg2: memref<64x128xf32, #tpu.memory_space<vmem>>, %arg3: memref<128x128xf32, #tpu.memory_space<vmem>>, %arg4: memref<64x1xf32, #tpu.memory_space<vmem>>, %arg5: memref<64x1xf32, #tpu.memory_space<vmem>>, %arg6: memref<64x1xf32, #tpu.memory_space<vmem>>, %arg7: memref<64x1xf32, #tpu.memory_space<vmem>>) attributes {dimension_semantics = [#tpu.dimension_semantics<parallel>, #tpu.dimension_semantics<arbitrary>], iteration_bounds = array<i64: 2, 1>, scalar_prefetch = 0 : i64, scratch_operands = 3 : i64, tpu.core_type = #tpu.core_type<tc>, window_params = [{transform_indices = @transform_0, window_bounds = array<i64: 64, 128>}, {transform_indices = @transform_1, window_bounds = array<i64: 128, 128>}, {transform_indices = @transform_2, window_bounds = array<i64: 64, 1>}]} {
    %c0_i32 = arith.constant 0 : i32
    %0 = arith.cmpi eq, %arg1, %c0_i32 : i32
    %1 = arith.extui %0 : i1 to i32
    %c0_i32_0 = arith.constant 0 : i32
    %2 = arith.cmpi ne, %1, %c0_i32_0 : i32
    scf.if %2 {
      %cst_34 = arith.constant -1.000000e+30 : f32
      %87 = vector.broadcast %cst_34 : f32 to vector<64x1xf32>
      %c0_35 = arith.constant 0 : index
      %c0_36 = arith.constant 0 : index
      %88 = vector.load %arg5[%c0_35, %c0_36] : memref<64x1xf32, #tpu.memory_space<vmem>>, vector<64x1xf32>
      tpu.vector_store %arg5[%c0_35, %c0_36], %87 {strides = array<i32>} : memref<64x1xf32, #tpu.memory_space<vmem>>, vector<64x1xf32>,
      %cst_37 = arith.constant 0.000000e+00 : f32
      %89 = vector.broadcast %cst_37 : f32 to vector<64x1xf32>
      %c0_38 = arith.constant 0 : index
      %c0_39 = arith.constant 0 : index
      %90 = vector.load %arg6[%c0_38, %c0_39] : memref<64x1xf32, #tpu.memory_space<vmem>>, vector<64x1xf32>
      tpu.vector_store %arg6[%c0_38, %c0_39], %89 {strides = array<i32>} : memref<64x1xf32, #tpu.memory_space<vmem>>, vector<64x1xf32>,
      %cst_40 = arith.constant 0.000000e+00 : f32
      %91 = vector.broadcast %cst_40 : f32 to vector<64x1xf32>
      %c0_41 = arith.constant 0 : index
      %c0_42 = arith.constant 0 : index
      %92 = vector.load %arg7[%c0_41, %c0_42] : memref<64x1xf32, #tpu.memory_space<vmem>>, vector<64x1xf32>
      tpu.vector_store %arg7[%c0_41, %c0_42], %91 {strides = array<i32>} : memref<64x1xf32, #tpu.memory_space<vmem>>, vector<64x1xf32>,
    } else {
    }
    %c0 = arith.constant 0 : index
    %c0_1 = arith.constant 0 : index
    %3 = vector.load %arg2[%c0, %c0_1] : memref<64x128xf32, #tpu.memory_space<vmem>>, vector<64x128xf32>
    %c0_2 = arith.constant 0 : index
    %c0_3 = arith.constant 0 : index
    %4 = vector.load %arg3[%c0_2, %c0_3] : memref<128x128xf32, #tpu.memory_space<vmem>>, vector<128x128xf32>
    %cst = arith.constant dense<0.000000e+00> : vector<64x128xf32>
    %5 = tpu.matmul %3, %4, %cst {dimension_numbers = #tpu.dot_dimension_numbers<[1], [1], [0], [0], [0, 0, 1, 0], [], []>} : vector<64x128xf32>, vector<128x128xf32>, vector<64x128xf32> -> vector<64x128xf32>
    %cst_4 = arith.constant 14.2857141 : f32
    %6 = vector.broadcast %cst_4 : f32 to vector<64x128xf32>
    %7 = arith.mulf %5, %6 : vector<64x128xf32>
    %c64_i32 = arith.constant 64 : i32
    %8 = arith.muli %arg0, %c64_i32 : i32
    %9 = tpu.iota {dimensions = array<i32: 0>} : vector<64x1xi32>
    %10 = vector.broadcast %8 : i32 to vector<64x1xi32>
    %11 = arith.addi %10, %9 : vector<64x1xi32>
    %c128_i32 = arith.constant 128 : i32
    %12 = arith.muli %arg1, %c128_i32 : i32
    %13 = tpu.iota {dimensions = array<i32: 1>} : vector<1x128xi32>
    %14 = vector.broadcast %12 : i32 to vector<1x128xi32>
    %15 = arith.addi %14, %13 : vector<1x128xi32>
    %16 = vector.broadcast %11 : vector<64x1xi32> to vector<64x128xi32>
    %17 = vector.broadcast %15 : vector<1x128xi32> to vector<64x128xi32>
    %18 = arith.cmpi ne, %16, %17 : vector<64x128xi32>
    %c8_i32 = arith.constant 8 : i32
    %19 = vector.broadcast %c8_i32 : i32 to vector<1x128xi32>
    %20 = arith.cmpi slt, %15, %19 : vector<1x128xi32>
    %21 = vector.broadcast %20 : vector<1x128xi1> to vector<64x128xi1>
    %22 = arith.andi %18, %21 : vector<64x128xi1>
    %c4_i32 = arith.constant 4 : i32
    %c0_i32_5 = arith.constant 0 : i32
    %23 = arith.cmpi eq, %c4_i32, %c0_i32_5 : i32
    %c1_i32 = arith.constant 1 : i32
    %24 = arith.select %23, %c1_i32, %c4_i32 : i32
    %25 = vector.broadcast %24 : i32 to vector<64x1xi32>
    %26 = arith.remsi %11, %25 : vector<64x1xi32>
    %c0_i32_6 = arith.constant 0 : i32
    %27 = vector.broadcast %c0_i32_6 : i32 to vector<64x1xi32>
    %28 = arith.cmpi ne, %26, %27 : vector<64x1xi32>
    %c0_i32_7 = arith.constant 0 : i32
    %29 = vector.broadcast %c0_i32_7 : i32 to vector<64x1xi32>
    %30 = arith.cmpi slt, %26, %29 : vector<64x1xi32>
    %c0_i32_8 = arith.constant 0 : i32
    %31 = arith.cmpi slt, %24, %c0_i32_8 : i32
    %32 = vector.broadcast %31 : i1 to vector<64x1xi1>
    %33 = vector.broadcast %32 : vector<64x1xi1> to vector<64x1xi1>
    %34 = arith.xori %30, %33 : vector<64x1xi1>
    %35 = arith.andi %34, %28 : vector<64x1xi1>
    %36 = vector.broadcast %24 : i32 to vector<64x1xi32>
    %37 = arith.addi %26, %36 : vector<64x1xi32>
    %38 = arith.select %35, %37, %26 : vector<64x1xi1>, vector<64x1xi32>
    %c4_i32_9 = arith.constant 4 : i32
    %c0_i32_10 = arith.constant 0 : i32
    %39 = arith.cmpi eq, %c4_i32_9, %c0_i32_10 : i32
    %c1_i32_11 = arith.constant 1 : i32
    %40 = arith.select %39, %c1_i32_11, %c4_i32_9 : i32
    %41 = vector.broadcast %40 : i32 to vector<1x128xi32>
    %42 = arith.remsi %15, %41 : vector<1x128xi32>
    %c0_i32_12 = arith.constant 0 : i32
    %43 = vector.broadcast %c0_i32_12 : i32 to vector<1x128xi32>
    %44 = arith.cmpi ne, %42, %43 : vector<1x128xi32>
    %c0_i32_13 = arith.constant 0 : i32
    %45 = vector.broadcast %c0_i32_13 : i32 to vector<1x128xi32>
    %46 = arith.cmpi slt, %42, %45 : vector<1x128xi32>
    %c0_i32_14 = arith.constant 0 : i32
    %47 = arith.cmpi slt, %40, %c0_i32_14 : i32
    %48 = vector.broadcast %47 : i1 to vector<1x128xi1>
    %49 = vector.broadcast %48 : vector<1x128xi1> to vector<1x128xi1>
    %50 = arith.xori %46, %49 : vector<1x128xi1>
    %51 = arith.andi %50, %44 : vector<1x128xi1>
    %52 = vector.broadcast %40 : i32 to vector<1x128xi32>
    %53 = arith.addi %42, %52 : vector<1x128xi32>
    %54 = arith.select %51, %53, %42 : vector<1x128xi1>, vector<1x128xi32>
    %55 = vector.broadcast %38 : vector<64x1xi32> to vector<64x128xi32>
    %56 = vector.broadcast %54 : vector<1x128xi32> to vector<64x128xi32>
    %57 = arith.cmpi eq, %55, %56 : vector<64x128xi32>
    %58 = arith.andi %22, %57 : vector<64x128xi1>
    %cst_15 = arith.constant -1.000000e+30 : f32
    %59 = vector.broadcast %cst_15 : f32 to vector<64x128xf32>
    %60 = arith.select %22, %7, %59 : vector<64x128xi1>, vector<64x128xf32>
    %c0_16 = arith.constant 0 : index
    %c0_17 = arith.constant 0 : index
    %61 = vector.load %arg5[%c0_16, %c0_17] : memref<64x1xf32, #tpu.memory_space<vmem>>, vector<64x1xf32>
    %cst_18 = arith.constant dense<0xFF800000> : vector<64xf32>
    %62 = vector.multi_reduction <maximumf>, %60, %cst_18 [1] : vector<64x128xf32> to vector<64xf32>
    %63 = vector.shape_cast %62 : vector<64xf32> to vector<64x1xf32>
    %64 = arith.maximumf %61, %63 : vector<64x1xf32>
    %65 = arith.subf %61, %64 : vector<64x1xf32>
    %66 = math.exp %65 : vector<64x1xf32>
    %67 = vector.broadcast %64 : vector<64x1xf32> to vector<64x128xf32>
    %68 = arith.subf %60, %67 : vector<64x128xf32>
    %69 = math.exp %68 : vector<64x128xf32>
    %c0_19 = arith.constant 0 : index
    %c0_20 = arith.constant 0 : index
    %70 = vector.load %arg6[%c0_19, %c0_20] : memref<64x1xf32, #tpu.memory_space<vmem>>, vector<64x1xf32>
    %71 = arith.mulf %66, %70 : vector<64x1xf32>
    %cst_21 = arith.constant dense<0.000000e+00> : vector<64xf32>
    %72 = vector.multi_reduction <add>, %69, %cst_21 [1] : vector<64x128xf32> to vector<64xf32>
    %73 = vector.shape_cast %72 : vector<64xf32> to vector<64x1xf32>
    %74 = arith.addf %71, %73 : vector<64x1xf32>
    %c0_22 = arith.constant 0 : index
    %c0_23 = arith.constant 0 : index
    %75 = vector.load %arg6[%c0_22, %c0_23] : memref<64x1xf32, #tpu.memory_space<vmem>>, vector<64x1xf32>
    tpu.vector_store %arg6[%c0_22, %c0_23], %74 {strides = array<i32>} : memref<64x1xf32, #tpu.memory_space<vmem>>, vector<64x1xf32>,
    %c0_24 = arith.constant 0 : index
    %c0_25 = arith.constant 0 : index
    %76 = vector.load %arg7[%c0_24, %c0_25] : memref<64x1xf32, #tpu.memory_space<vmem>>, vector<64x1xf32>
    %cst_26 = arith.constant 0.000000e+00 : f32
    %77 = vector.broadcast %cst_26 : f32 to vector<64x128xf32>
    %78 = arith.select %58, %7, %77 : vector<64x128xi1>, vector<64x128xf32>
    %cst_27 = arith.constant dense<0.000000e+00> : vector<64xf32>
    %79 = vector.multi_reduction <add>, %78, %cst_27 [1] : vector<64x128xf32> to vector<64xf32>
    %80 = vector.shape_cast %79 : vector<64xf32> to vector<64x1xf32>
    %81 = arith.addf %76, %80 : vector<64x1xf32>
    %c0_28 = arith.constant 0 : index
    %c0_29 = arith.constant 0 : index
    %82 = vector.load %arg7[%c0_28, %c0_29] : memref<64x1xf32, #tpu.memory_space<vmem>>, vector<64x1xf32>
    tpu.vector_store %arg7[%c0_28, %c0_29], %81 {strides = array<i32>} : memref<64x1xf32, #tpu.memory_space<vmem>>, vector<64x1xf32>,
    %c0_30 = arith.constant 0 : index
    %c0_31 = arith.constant 0 : index
    %83 = vector.load %arg5[%c0_30, %c0_31] : memref<64x1xf32, #tpu.memory_space<vmem>>, vector<64x1xf32>
    tpu.vector_store %arg5[%c0_30, %c0_31], %64 {strides = array<i32>} : memref<64x1xf32, #tpu.memory_space<vmem>>, vector<64x1xf32>,
    %c0_i32_32 = arith.constant 0 : i32
    %84 = arith.cmpi eq, %arg1, %c0_i32_32 : i32
    %85 = arith.extui %84 : i1 to i32
    %c0_i32_33 = arith.constant 0 : i32
    %86 = arith.cmpi ne, %85, %c0_i32_33 : i32
    scf.if %86 {
      %c0_34 = arith.constant 0 : index
      %c0_35 = arith.constant 0 : index
      %87 = vector.load %arg5[%c0_34, %c0_35] : memref<64x1xf32, #tpu.memory_space<vmem>>, vector<64x1xf32>
      %c0_36 = arith.constant 0 : index
      %c0_37 = arith.constant 0 : index
      %88 = vector.load %arg6[%c0_36, %c0_37] : memref<64x1xf32, #tpu.memory_space<vmem>>, vector<64x1xf32>
      %89 = math.log %88 : vector<64x1xf32>
      %90 = arith.addf %87, %89 : vector<64x1xf32>
      %c0_38 = arith.constant 0 : index
      %c0_39 = arith.constant 0 : index
      %91 = vector.load %arg7[%c0_38, %c0_39] : memref<64x1xf32, #tpu.memory_space<vmem>>, vector<64x1xf32>
      %cst_40 = arith.constant 1.000000e+00 : f32
      %92 = vector.broadcast %cst_40 : f32 to vector<64x1xf32>
      %93 = arith.mulf %91, %92 : vector<64x1xf32>
      %94 = arith.subf %93, %90 : vector<64x1xf32>
      %cst_41 = arith.constant -1.000000e+00 : f32
      %95 = vector.broadcast %cst_41 : f32 to vector<64x1xf32>
      %96 = arith.mulf %95, %94 : vector<64x1xf32>
      %c8_i32_42 = arith.constant 8 : i32
      %97 = vector.broadcast %c8_i32_42 : i32 to vector<64x1xi32>
      %98 = arith.cmpi slt, %11, %97 : vector<64x1xi32>
      %cst_43 = arith.constant 0.000000e+00 : f32
      %99 = vector.broadcast %cst_43 : f32 to vector<64x1xf32>
      %100 = arith.select %98, %96, %99 : vector<64x1xi1>, vector<64x1xf32>
      %c0_44 = arith.constant 0 : index
      %c0_45 = arith.constant 0 : index
      %101 = vector.load %arg4[%c0_44, %c0_45] : memref<64x1xf32, #tpu.memory_space<vmem>>, vector<64x1xf32>
      tpu.vector_store %arg4[%c0_44, %c0_45], %100 {strides = array<i32>} : memref<64x1xf32, #tpu.memory_space<vmem>>, vector<64x1xf32>,
    } else {
    }
    return
  }
  func.func @transform_0(%arg0: i32, %arg1: i32) -> (i32, i32) {
    %c0_i32 = arith.constant 0 : i32
    %c0_i32_0 = arith.constant 0 : i32
    return %arg0, %c0_i32 : i32, i32
  }
  func.func @transform_1(%arg0: i32, %arg1: i32) -> (i32, i32) {
    %c0_i32 = arith.constant 0 : i32
    %c0_i32_0 = arith.constant 0 : i32
    return %arg1, %c0_i32 : i32, i32
  }
  func.func @transform_2(%arg0: i32, %arg1: i32) -> (i32, i32) {
    %c0_i32 = arith.constant 0 : i32
    %c0_i32_0 = arith.constant 0 : i32
    return %arg0, %c0_i32 : i32, i32
  }
}

</mosaic_0001>

<llo_original>
// kernel: tpu_custom_call.1
$region0: #{tpu_custom_call.1}
  #allocation0 [shape = 'u32[]', space=smem, size = 0x4, offset = 0x4, fixed_abs, tag = 'smem constant byte address 0x4 - core index']
  #allocation1 [shape = 'u32[144,128]{1,0:T(1,128)}', space=vmem, size = 0x12000, scoped, tag = 'internal scratch']
  #allocation2 [shape = 'f32[64,1]{1,0:T(8,128)}', space=vmem, size = 0x8000, scoped, tag = 'scratch operand']
  #allocation3 [shape = 'f32[64,1]{1,0:T(8,128)}', space=vmem, size = 0x8000, scoped, tag = 'scratch operand']
  #allocation4 [shape = 'f32[64,1]{1,0:T(8,128)}', space=vmem, size = 0x8000, scoped, tag = 'scratch operand']
  %s0 = inlined_call_operand.hbm [shape: f32[128,128], index: 0, kind: input, shape index: {}]
  %s1 = inlined_call_operand.hbm [shape: f32[128,128], index: 1, kind: input, shape index: {}]
  %s2 = inlined_call_operand.vmem [shape: f32[128,1], index: 2, kind: output, shape index: {}]
  %s3 = sld [smem:[#allocation0]]
  $region57: #{tpu_custom_call.1} parent=0
    _
  %s5 = ssub.s32 1, %s3
  %s6 = scalar_select 0, %s5, %s3
  $region1: #{tpu_custom_call.1} parent=0
    #allocation5 [shape = 'u8[65536]{0}', space=vmem, size = 0x10000, scoped, tag = 'input window, operand 0']
    #allocation6 [shape = 's32[2]{0}', space=sflag, size = 0x8, scoped, tag = 'scoped memory for tpu_custom_call.1']
    #allocation7 [shape = 'u8[65536]{0}', space=vmem, size = 0x10000, scoped, tag = 'input window, operand 1, single buffered']
    #allocation8 [shape = 's32[1]{0}', space=sflag, size = 0x4, scoped, tag = 'scoped memory for tpu_custom_call.1']
    %7 = vsyncpa [#allocation6], 0
    %s8 = scalar_lea.sflag [#allocation6], 1
    %9 = vsyncpa %s8, 0
    %10 = vsyncpa [#allocation8], 0
    loop: start=0, step=1, limit=4
    $region2: #{tpu_custom_call.1} parent=1 // loop_pre_header
      _
    $region3: #{tpu_custom_call.1} parent=1 // loop_header
      %s12 = sphi 0, %s16
      %p13 = scmp.ge.s32.totalorder %s12, 4
      %s19 = sphi 0, %s31
      %s20 = sphi 0, %s27
      %s21 = sphi 0, %s19
      %s22 = sphi 0, %s20
      %s23 = sphi 0, %s21
      %s24 = sphi 0, %s22
      %s34 = sphi 0, %s36
      %s37 = sphi 0, %s34
      %s38 = sphi 0, %s37
      %s54 = sphi 0, %s38
      %s60 = sphi 0, %s62
      %s63 = sphi 0, %s60
      %s64 = sphi 0, %s63
      %s80 = sphi 0, %s64
      %s86 = sphi 0, %s88
      %s89 = sphi 0, %s86
      %s90 = sphi 0, %s89
      %s106 = sphi 0, %s90
    $region4: #{tpu_custom_call.1} parent=1 // loop_header_branch
      %15 = sbr.rel (%p13) target = $region8
    $region5: #{tpu_custom_call.1} parent=1 // loop_body
      %s17 = ssub.s32 %s12, 1
      %s18 = ssub.s32 %s12, 2
      %s25 = sadd.s32 1, %s20
      %p26 = scmp.ge.s32.totalorder %s25, 1
      %s27 = scalar_select %p26, 0, %s25
      %s28 = sadd.s32 1, %s19
      %s29 = scalar_select %p26, %s28, %s19
      %p30 = scmp.ge.s32.totalorder %s29, 2
      %s31 = scalar_select %p30, 0, %s29
      %s32 = ssub.s32 %s19, %s31
      %p33 = scmp.eq.s32.totalorder %s32, 0
      %s35 = sadd.s32 %s34, 1
      %s36 = scalar_select %p33, %s34, %s35
      %p39 = pneg %p33
      %p40 = scmp.eq.s32.totalorder %s12, 1
      %p41 = por %p39, %p40
      %p42 = scmp.ne.s32.totalorder %s34, %s37
      %p43 = scmp.eq.s32.totalorder %s12, 0
      %p44 = por %p42, %p43
      %p45 = scmp.ne.s32.totalorder %s34, %s37
      %p46 = scmp.eq.s32.totalorder %s17, 1
      %p47 = por %p45, %p46
      %p48 = scmp.ne.s32.totalorder %s37, %s38
      %p49 = scmp.eq.s32.totalorder %s17, 0
      %p50 = por %p48, %p49
      %p51 = scmp.ne.s32.totalorder %s37, %s38
      %p52 = scmp.eq.s32.totalorder %s18, 1
      %p53 = por %p51, %p52
      %p55 = scmp.ne.s32.totalorder %s38, %s54
      %p56 = scmp.eq.s32.totalorder %s18, 0
      %p57 = por %p55, %p56
      %s58 = ssub.s32 %s20, %s27
      %p59 = scmp.eq.s32.totalorder %s58, 0
      %s61 = sadd.s32 %s60, 1
      %s62 = scalar_select %p59, %s60, %s61
      %p65 = pneg %p59
      %p66 = scmp.eq.s32.totalorder %s12, 1
      %p67 = por %p65, %p66
      %p68 = scmp.ne.s32.totalorder %s60, %s63
      %p69 = scmp.eq.s32.totalorder %s12, 0
      %p70 = por %p68, %p69
      %p71 = scmp.ne.s32.totalorder %s60, %s63
      %p72 = scmp.eq.s32.totalorder %s17, 1
      %p73 = por %p71, %p72
      %p74 = scmp.ne.s32.totalorder %s63, %s64
      %p75 = scmp.eq.s32.totalorder %s17, 0
      %p76 = por %p74, %p75
      %p77 = scmp.ne.s32.totalorder %s63, %s64
      %p78 = scmp.eq.s32.totalorder %s18, 1
      %p79 = por %p77, %p78
      %p81 = scmp.ne.s32.totalorder %s64, %s80
      %p82 = scmp.eq.s32.totalorder %s18, 0
      %p83 = por %p81, %p82
      %s84 = ssub.s32 %s19, %s31
      %p85 = scmp.eq.s32.totalorder %s84, 0
      %s87 = sadd.s32 %s86, 1
      %s88 = scalar_select %p85, %s86, %s87
      %p91 = pneg %p85
      %p92 = scmp.eq.s32.totalorder %s12, 1
      %p93 = por %p91, %p92
      %p94 = scmp.ne.s32.totalorder %s86, %s89
      %p95 = scmp.eq.s32.totalorder %s12, 0
      %p96 = por %p94, %p95
      %p97 = scmp.ne.s32.totalorder %s86, %s89
      %p98 = scmp.eq.s32.totalorder %s17, 1
      %p99 = por %p97, %p98
      %p100 = scmp.ne.s32.totalorder %s89, %s90
      %p101 = scmp.eq.s32.totalorder %s17, 0
      %p102 = por %p100, %p101
      %p103 = scmp.ne.s32.totalorder %s89, %s90
      %p104 = scmp.eq.s32.totalorder %s18, 1
      %p105 = por %p103, %p104
      %p107 = scmp.ne.s32.totalorder %s90, %s106
      %p108 = scmp.eq.s32.totalorder %s18, 0
      %p109 = por %p107, %p108
      %p110 = scmp.le.s32.totalorder 1, %s12
      %p111 = scmp.lt.s32.totalorder %s12, 3
      %p112 = pnand %p110, %p111
      %p113 = pneg %p112
      // Predicated region
      $region9: #{tpu_custom_call.1} parent=5 // pred_check
        _
      $region10: #{tpu_custom_call.1} parent=5 // pred_check_branch
        %115 = sbr.rel (%p112) target = $region12
      $region11: #{tpu_custom_call.1} parent=5 // pred_region
        %s116 = ssub.s32 %s12, 1
        // Predicated region
        $region13: #{tpu_custom_call.1} parent=11 // pred_check
          %p117 = pneg %p76
        $region14: #{tpu_custom_call.1} parent=11 // pred_check_branch
          %119 = sbr.rel (%p117) target = $region16
        $region15: #{tpu_custom_call.1} parent=11 // pred_region
          %s120 = smul.u32 16, %s22
          %s122 = ssub.s32 2048, 2048
          %123 = vsyncadd [#allocation8], %s122
          %s124 = smul.addr %s120, 128
          %s125 = scalar_lea.hbm %s1, %s124
          %s126 = sshll.u32 [#allocation7], 4
          %s127 = int_to_ptr.vmem [resolvable:$true] %s126
          %132 = dma.hbm_to_vmem [thread:$0]  %s125, 2048, %s127, [#allocation8], 128, 128, 8
        $region16: #{tpu_custom_call.1} parent=11 // pred_fallthru
          _
      $region12: #{tpu_custom_call.1} parent=5 // pred_fallthru
        _
      %p133 = scmp.lt.s32.totalorder %s12, 2
      // Predicated region
      $region17: #{tpu_custom_call.1} parent=5 // pred_check
        %p134 = pneg %p133
      $region18: #{tpu_custom_call.1} parent=5 // pred_check_branch
        %136 = sbr.rel (%p134) target = $region20
      $region19: #{tpu_custom_call.1} parent=5 // pred_region
        // Predicated region
        $region21: #{tpu_custom_call.1} parent=19 // pred_check
          %p137 = pneg %p44
        $region22: #{tpu_custom_call.1} parent=19 // pred_check_branch
          %139 = sbr.rel (%p137) target = $region24
        $region23: #{tpu_custom_call.1} parent=19 // pred_region
          %s140 = sand.u32 %s34, 1
          %s141 = scalar_lea.sflag [#allocation6], %s140
          %s142 = sand.u32 %s34, 1
          %s143 = smul.addr %s142, 64
          %s144 = scalar_lea.vmem [#allocation5], %s143
          %s145 = smul.u32 8, %s19
          %s147 = ssub.s32 1024, 1024
          %148 = vsyncadd %s141, %s147
          %s149 = smul.addr %s145, 128
          %s150 = scalar_lea.hbm %s0, %s149
          %s151 = sshll.u32 %s144, 4
          %s152 = int_to_ptr.vmem [resolvable:$true] %s151
          %157 = dma.hbm_to_vmem [thread:$0]  %s150, 1024, %s152, %s141, 128, 128, 8
        $region24: #{tpu_custom_call.1} parent=19 // pred_fallthru
          _
      $region20: #{tpu_custom_call.1} parent=5 // pred_fallthru
        _
      %p158 = scmp.le.s32.totalorder 1, %s12
      %p159 = scmp.lt.s32.totalorder %s12, 3
      %p160 = pnand %p158, %p159
      %p161 = pneg %p160
      // Predicated region
      $region25: #{tpu_custom_call.1} parent=5 // pred_check
        _
      $region26: #{tpu_custom_call.1} parent=5 // pred_check_branch
        %163 = sbr.rel (%p160) target = $region28
      $region27: #{tpu_custom_call.1} parent=5 // pred_region
        %s164 = ssub.s32 %s12, 1
        %s165 = sand.u32 %s37, 1
        %s166 = scalar_lea.sflag [#allocation6], %s165
        %s167 = sand.u32 %s37, 1
        %s168 = smul.addr %s167, 64
        %s169 = scalar_lea.vmem [#allocation5], %s168
        // Predicated region
        $region29: #{tpu_custom_call.1} parent=27 // pred_check
          %p170 = pneg %p50
        $region30: #{tpu_custom_call.1} parent=27 // pred_check_branch
          %172 = sbr.rel (%p170) target = $region32
        $region31: #{tpu_custom_call.1} parent=27 // pred_region
          %173 = dma.done %s166, 1024
        $region32: #{tpu_custom_call.1} parent=27 // pred_fallthru
          _
        // Predicated region
        $region33: #{tpu_custom_call.1} parent=27 // pred_check
          %p174 = pneg %p76
        $region34: #{tpu_custom_call.1} parent=27 // pred_check_branch
          %176 = sbr.rel (%p174) target = $region36
        $region35: #{tpu_custom_call.1} parent=27 // pred_region
          %177 = dma.done [#allocation8], 2048
        $region36: #{tpu_custom_call.1} parent=27 // pred_fallthru
          _
        %s178 = sand.u32 %s37, 1
        %s179 = scalar_lea.sflag [#allocation6], %s178
        %s180 = sand.u32 %s37, 1
        %s181 = smul.addr %s180, 64
        %s182 = scalar_lea.vmem [#allocation5], %s181
        %p183 = pneg %p50
        %p184 = pneg %p47
        %p185 = pneg %p76
        %p186 = pneg %p73
        %p187 = pneg %p102
        %p188 = pneg %p99
        %s189 = smul.u32 8, %s21
        %p190 = scmp.lt.s32.totalorder %s189, 15
        %s191 = scalar_select %p190, %s189, 15
        %s192 = smul.addr %s191, 8
        %s193 = scalar_lea.vmem %s2, %s192
        %s194 = smul.u32 8, %s21
        %s195 = smul.u32 16, %s22
        %s196 = smul.u32 8, %s21
        %p197 = scmp.lt.s32.totalorder %s196, 15
        %s198 = scalar_select %p197, %s196, 15
        %s199 = smul.addr %s198, 8
        %s200 = scalar_lea.vmem %s2, %s199
        %s201 = smul.u32 8, %s21
        %p202 = scmp.eq.s32.totalorder %s22, 0
        // Predicated region
        $region37: #{tpu_custom_call.1} parent=27 // pred_check
          %p203 = pneg %p202
        $region38: #{tpu_custom_call.1} parent=27 // pred_check_branch
          %205 = sbr.rel (%p203) target = $region40
        $region39: #{tpu_custom_call.1} parent=27 // pred_region
          %vm206 = vcmask 7168
          %207 = vst.msk [vmem:[#allocation2] sm:$0xff] %vm206, -1e+30
          %208 = vst.msk [vmem:[#allocation2 + $0x8] sm:$0xff] %vm206, -1e+30
          %209 = vst.msk [vmem:[#allocation2 + $0x10] sm:$0xff] %vm206, -1e+30
          %210 = vst.msk [vmem:[#allocation2 + $0x18] sm:$0xff] %vm206, -1e+30
          %211 = vst.msk [vmem:[#allocation2 + $0x20] sm:$0xff] %vm206, -1e+30
          %212 = vst.msk [vmem:[#allocation2 + $0x28] sm:$0xff] %vm206, -1e+30
          %213 = vst.msk [vmem:[#allocation2 + $0x30] sm:$0xff] %vm206, -1e+30
          %214 = vst.msk [vmem:[#allocation2 + $0x38] sm:$0xff] %vm206, -1e+30
          %215 = vst.msk [vmem:[#allocation3] sm:$0xff] %vm206, 0.0
          %216 = vst.msk [vmem:[#allocation3 + $0x8] sm:$0xff] %vm206, 0.0
          %217 = vst.msk [vmem:[#allocation3 + $0x10] sm:$0xff] %vm206, 0.0
          %218 = vst.msk [vmem:[#allocation3 + $0x18] sm:$0xff] %vm206, 0.0
          %219 = vst.msk [vmem:[#allocation3 + $0x20] sm:$0xff] %vm206, 0.0
          %220 = vst.msk [vmem:[#allocation3 + $0x28] sm:$0xff] %vm206, 0.0
          %221 = vst.msk [vmem:[#allocation3 + $0x30] sm:$0xff] %vm206, 0.0
          %222 = vst.msk [vmem:[#allocation3 + $0x38] sm:$0xff] %vm206, 0.0
          %223 = vst.msk [vmem:[#allocation4] sm:$0xff] %vm206, 0.0
          %224 = vst.msk [vmem:[#allocation4 + $0x8] sm:$0xff] %vm206, 0.0
          %225 = vst.msk [vmem:[#allocation4 + $0x10] sm:$0xff] %vm206, 0.0
          %226 = vst.msk [vmem:[#allocation4 + $0x18] sm:$0xff] %vm206, 0.0
          %227 = vst.msk [vmem:[#allocation4 + $0x20] sm:$0xff] %vm206, 0.0
          %228 = vst.msk [vmem:[#allocation4 + $0x28] sm:$0xff] %vm206, 0.0
          %229 = vst.msk [vmem:[#allocation4 + $0x30] sm:$0xff] %vm206, 0.0
          %230 = vst.msk [vmem:[#allocation4 + $0x38] sm:$0xff] %vm206, 0.0
        $region40: #{tpu_custom_call.1} parent=27 // pred_fallthru
          _
        %v231 = vld [vmem:[%s169] sm:$0xff]
        %v232 = vld [vmem:[%s169 + $0x8] sm:$0xff]
        %v233 = vld [vmem:[%s169 + $0x10] sm:$0xff]
        %v234 = vld [vmem:[%s169 + $0x18] sm:$0xff]
        %v235 = vld [vmem:[%s169 + $0x20] sm:$0xff]
        %v236 = vld [vmem:[%s169 + $0x28] sm:$0xff]
        %v237 = vld [vmem:[%s169 + $0x30] sm:$0xff]
        %v238 = vld [vmem:[%s169 + $0x38] sm:$0xff]
        %v239 = vld [vmem:[#allocation7] sm:$0xff]
        %v240 = vld [vmem:[#allocation7 + $0x8] sm:$0xff]
        %v241 = vld [vmem:[#allocation7 + $0x10] sm:$0xff]
        %v242 = vld [vmem:[#allocation7 + $0x18] sm:$0xff]
        %v243 = vld [vmem:[#allocation7 + $0x20] sm:$0xff]
        %v244 = vld [vmem:[#allocation7 + $0x28] sm:$0xff]
        %v245 = vld [vmem:[#allocation7 + $0x30] sm:$0xff]
        %v246 = vld [vmem:[#allocation7 + $0x38] sm:$0xff]
        %v247 = vld [vmem:[#allocation7 + $0x40] sm:$0xff]
        %v248 = vld [vmem:[#allocation7 + $0x48] sm:$0xff]
        %v249 = vld [vmem:[#allocation7 + $0x50] sm:$0xff]
        %v250 = vld [vmem:[#allocation7 + $0x58] sm:$0xff]
        %v251 = vld [vmem:[#allocation7 + $0x60] sm:$0xff]
        %v252 = vld [vmem:[#allocation7 + $0x68] sm:$0xff]
        %v253 = vld [vmem:[#allocation7 + $0x70] sm:$0xff]
        %v254 = vld [vmem:[#allocation7 + $0x78] sm:$0xff]
        %255 = vmatprep.subr.mxu0 0.0
        %256 = vmatpush1.xpose.msra.mxu0 %v254
        %257 = vmatprep.subr.mxu0 0.0
        %258 = vmatpush1.xpose.msra.mxu0 %v253
        %259 = vmatprep.subr.mxu0 0.0
        %260 = vmatpush1.xpose.msra.mxu0 %v252
        %261 = vmatprep.subr.mxu0 0.0
        %262 = vmatpush1.xpose.msra.mxu0 %v251
        %263 = vmatprep.subr.mxu0 0.0
        %264 = vmatpush1.xpose.msra.mxu0 %v250
        %265 = vmatprep.subr.mxu0 0.0
        %266 = vmatpush1.xpose.msra.mxu0 %v249
        %267 = vmatprep.subr.mxu0 0.0
        %268 = vmatpush1.xpose.msra.mxu0 %v248
        %269 = vmatprep.subr.mxu0 0.0
        %270 = vmatpush1.xpose.msra.mxu0 %v247
        %271 = vmatprep.subr.mxu0 0.0
        %272 = vmatpush1.xpose.msra.mxu0 %v246
        %273 = vmatprep.subr.mxu0 0.0
        %274 = vmatpush1.xpose.msra.mxu0 %v245
        %275 = vmatprep.subr.mxu0 0.0
        %276 = vmatpush1.xpose.msra.mxu0 %v244
        %277 = vmatprep.subr.mxu0 0.0
        %278 = vmatpush1.xpose.msra.mxu0 %v243
        %279 = vmatprep.subr.mxu0 0.0
        %280 = vmatpush1.xpose.msra.mxu0 %v242
        %281 = vmatprep.subr.mxu0 0.0
        %282 = vmatpush1.xpose.msra.mxu0 %v241
        %283 = vmatprep.subr.mxu0 0.0
        %284 = vmatpush1.xpose.msra.mxu0 %v240
        %285 = vmatprep.subr.mxu0 0.0
        %286 = vmatpush1.xpose.msra.mxu0 %v239
        %287 = vmatprep.subr.mxu0 0.0
        %288 = vmatpush2.xpose.msra.mxu0 0.0
        %289 = vmatprep.subr.mxu0 0.0
        %290 = vmatpush2.xpose.msra.mxu0 0.0
        %291 = vmatprep.subr.mxu0 0.0
        %292 = vmatpush2.xpose.msra.mxu0 0.0
        %293 = vmatprep.subr.mxu0 0.0
        %294 = vmatpush2.xpose.msra.mxu0 0.0
        %295 = vmatprep.subr.mxu0 0.0
        %296 = vmatpush2.xpose.msra.mxu0 0.0
        %297 = vmatprep.subr.mxu0 0.0
        %298 = vmatpush2.xpose.msra.mxu0 0.0
        %299 = vmatprep.subr.mxu0 0.0
        %300 = vmatpush2.xpose.msra.mxu0 0.0
        %301 = vmatprep.subr.mxu0 0.0
        %302 = vmatpush2.xpose.msra.mxu0 0.0
        %303 = vmatprep.subr.mxu0 0.0
        %304 = vmatpush2.xpose.msra.mxu0 0.0
        %305 = vmatprep.subr.mxu0 0.0
        %306 = vmatpush2.xpose.msra.mxu0 0.0
        %307 = vmatprep.subr.mxu0 0.0
        %308 = vmatpush2.xpose.msra.mxu0 0.0
        %309 = vmatprep.subr.mxu0 0.0
        %310 = vmatpush2.xpose.msra.mxu0 0.0
        %311 = vmatprep.subr.mxu0 0.0
        %312 = vmatpush2.xpose.msra.mxu0 0.0
        %313 = vmatprep.subr.mxu0 0.0
        %314 = vmatpush2.xpose.msra.mxu0 0.0
        %315 = vmatprep.subr.mxu0 0.0
        %316 = vmatpush2.xpose.msra.mxu0 0.0
        %317 = vmatprep.subr.mxu0 0.0
        %318 = vmatpush2.xpose.msra.mxu0 0.0
        %319 = vmatprep.mubr.f32.mxu0 0.0
        %320 = vmatmul.mubr.f32.gmra.mxu0 %v231
        %v321 = vpop.f32.mrf.mxu0
        %v322 = vadd.f32 0.0, %v321
        %v323 = vpop.f32.mrf.mxu0
        %324 = vmatprep.mubr.f32.mxu0 0.0
        %325 = vmatmul.mubr.f32.gmra.mxu0 %v232
        %v326 = vpop.f32.mrf.mxu0
        %v327 = vadd.f32 0.0, %v326
        %v328 = vpop.f32.mrf.mxu0
        %329 = vmatprep.mubr.f32.mxu0 0.0
        %330 = vmatmul.mubr.f32.gmra.mxu0 %v233
        %v331 = vpop.f32.mrf.mxu0
        %v332 = vadd.f32 0.0, %v331
        %v333 = vpop.f32.mrf.mxu0
        %334 = vmatprep.mubr.f32.mxu0 0.0
        %335 = vmatmul.mubr.f32.gmra.mxu0 %v234
        %v336 = vpop.f32.mrf.mxu0
        %v337 = vadd.f32 0.0, %v336
        %v338 = vpop.f32.mrf.mxu0
        %339 = vmatprep.mubr.f32.mxu0 0.0
        %340 = vmatmul.mubr.f32.gmra.mxu0 %v235
        %v341 = vpop.f32.mrf.mxu0
        %v342 = vadd.f32 0.0, %v341
        %v343 = vpop.f32.mrf.mxu0
        %344 = vmatprep.mubr.f32.mxu0 0.0
        %345 = vmatmul.mubr.f32.gmra.mxu0 %v236
        %v346 = vpop.f32.mrf.mxu0
        %v347 = vadd.f32 0.0, %v346
        %v348 = vpop.f32.mrf.mxu0
        %349 = vmatprep.mubr.f32.mxu0 0.0
        %350 = vmatmul.mubr.f32.gmra.mxu0 %v237
        %v351 = vpop.f32.mrf.mxu0
        %v352 = vadd.f32 0.0, %v351
        %v353 = vpop.f32.mrf.mxu0
        %354 = vmatprep.mubr.f32.mxu0 0.0
        %355 = vmatmul.mubr.f32.gmra.mxu0 %v238
        %v356 = vpop.f32.mrf.mxu0
        %v357 = vadd.f32 0.0, %v356
        %v358 = vpop.f32.mrf.mxu0
        %359 = vdwg.mxu0
        %v360 = vmul.f32 %v322, 14.285714
        %v361 = vmul.f32 %v327, 14.285714
        %v362 = vmul.f32 %v332, 14.285714
        %v363 = vmul.f32 %v337, 14.285714
        %v364 = vmul.f32 %v342, 14.285714
        %v365 = vmul.f32 %v347, 14.285714
        %v366 = vmul.f32 %v352, 14.285714
        %v367 = vmul.f32 %v357, 14.285714
        %s368 = smul.u32 %s21, 64
        %v369 = vlaneseq
        %v370 = vshrl.u32 %v369, 7
        %v371 = vadd.s32 %v370, 8
        %v372 = vadd.s32 %v370, 16
        %v373 = vadd.s32 %v370, 24
        %v374 = vadd.s32 %v370, 32
        %v375 = vadd.s32 %v370, 40
        %v376 = vadd.s32 %v370, 48
        %v377 = vadd.s32 %v370, 56
        %v378 = vstv %s368
        %v379 = vadd.s32 %v378, %v370
        %v380 = vadd.s32 %v378, %v371
        %v381 = vadd.s32 %v378, %v372
        %v382 = vadd.s32 %v378, %v373
        %v383 = vadd.s32 %v378, %v374
        %v384 = vadd.s32 %v378, %v375
        %v385 = vadd.s32 %v378, %v376
        %v386 = vadd.s32 %v378, %v377
        %s387 = smul.u32 %s22, 128
        %v388 = vlaneseq
        %v389 = vand.u32 %v388, 127
        %v390 = vstv %s387
        %v391 = vadd.s32 %v390, %v389
        %vm392 = vcmp.ne.s32.totalorder %v379, %v391
        %vm393 = vcmp.ne.s32.totalorder %v380, %v391
        %vm394 = vcmp.ne.s32.totalorder %v381, %v391
        %vm395 = vcmp.ne.s32.totalorder %v382, %v391
        %vm396 = vcmp.ne.s32.totalorder %v383, %v391
        %vm397 = vcmp.ne.s32.totalorder %v384, %v391
        %vm398 = vcmp.ne.s32.totalorder %v385, %v391
        %vm399 = vcmp.ne.s32.totalorder %v386, %v391
        %vm400 = vcmp.lt.s32.totalorder %v391, 8
        %v401 = vsel %vm400, 1, 0
        %vm402 = vcmp.eq.s32.totalorder %v401, 1
        %vm403 = vmand %vm392, %vm402
        %vm404 = vmand %vm393, %vm402
        %vm405 = vmand %vm394, %vm402
        %vm406 = vmand %vm395, %vm402
        %vm407 = vmand %vm396, %vm402
        %vm408 = vmand %vm397, %vm402
        %vm409 = vmand %vm398, %vm402
        %vm410 = vmand %vm399, %vm402
        %vm411 = vcmp.lt.s32.totalorder %v379, 0
        %v412 = vsub.s32 0, %v379
        %v413 = vsel %vm411, %v412, %v379
        %v414 = vshrl.u32 %v413, 2
        %v415 = vand.u32 %v413, 3
        %v416 = vsub.s32 0, %v415
        %v417 = vsel %vm411, %v416, %v415
        %vm418 = vcmp.lt.s32.totalorder %v380, 0
        %v419 = vsub.s32 0, %v380
        %v420 = vsel %vm418, %v419, %v380
        %v421 = vshrl.u32 %v420, 2
        %v422 = vand.u32 %v420, 3
        %v423 = vsub.s32 0, %v422
        %v424 = vsel %vm418, %v423, %v422
        %vm425 = vcmp.lt.s32.totalorder %v381, 0
        %v426 = vsub.s32 0, %v381
        %v427 = vsel %vm425, %v426, %v381
        %v428 = vshrl.u32 %v427, 2
        %v429 = vand.u32 %v427, 3
        %v430 = vsub.s32 0, %v429
        %v431 = vsel %vm425, %v430, %v429
        %vm432 = vcmp.lt.s32.totalorder %v382, 0
        %v433 = vsub.s32 0, %v382
        %v434 = vsel %vm432, %v433, %v382
        %v435 = vshrl.u32 %v434, 2
        %v436 = vand.u32 %v434, 3
        %v437 = vsub.s32 0, %v436
        %v438 = vsel %vm432, %v437, %v436
        %vm439 = vcmp.lt.s32.totalorder %v383, 0
        %v440 = vsub.s32 0, %v383
        %v441 = vsel %vm439, %v440, %v383
        %v442 = vshrl.u32 %v441, 2
        %v443 = vand.u32 %v441, 3
        %v444 = vsub.s32 0, %v443
        %v445 = vsel %vm439, %v444, %v443
        %vm446 = vcmp.lt.s32.totalorder %v384, 0
        %v447 = vsub.s32 0, %v384
        %v448 = vsel %vm446, %v447, %v384
        %v449 = vshrl.u32 %v448, 2
        %v450 = vand.u32 %v448, 3
        %v451 = vsub.s32 0, %v450
        %v452 = vsel %vm446, %v451, %v450
        %vm453 = vcmp.lt.s32.totalorder %v385, 0
        %v454 = vsub.s32 0, %v385
        %v455 = vsel %vm453, %v454, %v385
        %v456 = vshrl.u32 %v455, 2
        %v457 = vand.u32 %v455, 3
        %v458 = vsub.s32 0, %v457
        %v459 = vsel %vm453, %v458, %v457
        %vm460 = vcmp.lt.s32.totalorder %v386, 0
        %v461 = vsub.s32 0, %v386
        %v462 = vsel %vm460, %v461, %v386
        %v463 = vshrl.u32 %v462, 2
        %v464 = vand.u32 %v462, 3
        %v465 = vsub.s32 0, %v464
        %v466 = vsel %vm460, %v465, %v464
        %vm467 = vcmp.ne.s32.totalorder %v417, 0
        %vm468 = vcmp.ne.s32.totalorder %v424, 0
        %vm469 = vcmp.ne.s32.totalorder %v431, 0
        %vm470 = vcmp.ne.s32.totalorder %v438, 0
        %vm471 = vcmp.ne.s32.totalorder %v445, 0
        %vm472 = vcmp.ne.s32.totalorder %v452, 0
        %vm473 = vcmp.ne.s32.totalorder %v459, 0
        %vm474 = vcmp.ne.s32.totalorder %v466, 0
        %vm475 = vcmp.lt.s32.totalorder %v417, 0
        %vm476 = vcmp.lt.s32.totalorder %v424, 0
        %vm477 = vcmp.lt.s32.totalorder %v431, 0
        %vm478 = vcmp.lt.s32.totalorder %v438, 0
        %vm479 = vcmp.lt.s32.totalorder %v445, 0
        %vm480 = vcmp.lt.s32.totalorder %v452, 0
        %vm481 = vcmp.lt.s32.totalorder %v459, 0
        %vm482 = vcmp.lt.s32.totalorder %v466, 0
        %vm483 = vmand %vm475, %vm467
        %vm484 = vmand %vm476, %vm468
        %vm485 = vmand %vm477, %vm469
        %vm486 = vmand %vm478, %vm470
        %vm487 = vmand %vm479, %vm471
        %vm488 = vmand %vm480, %vm472
        %vm489 = vmand %vm481, %vm473
        %vm490 = vmand %vm482, %vm474
        %v491 = vadd.s32 %v417, 4
        %v492 = vadd.s32 %v424, 4
        %v493 = vadd.s32 %v431, 4
        %v494 = vadd.s32 %v438, 4
        %v495 = vadd.s32 %v445, 4
        %v496 = vadd.s32 %v452, 4
        %v497 = vadd.s32 %v459, 4
        %v498 = vadd.s32 %v466, 4
        %v499 = vsel %vm483, %v491, %v417
        %v500 = vsel %vm484, %v492, %v424
        %v501 = vsel %vm485, %v493, %v431
        %v502 = vsel %vm486, %v494, %v438
        %v503 = vsel %vm487, %v495, %v445
        %v504 = vsel %vm488, %v496, %v452
        %v505 = vsel %vm489, %v497, %v459
        %v506 = vsel %vm490, %v498, %v466
        %vm507 = vcmp.lt.s32.totalorder %v391, 0
        %v508 = vsub.s32 0, %v391
        %v509 = vsel %vm507, %v508, %v391
        %v510 = vshrl.u32 %v509, 2
        %v511 = vand.u32 %v509, 3
        %v512 = vsub.s32 0, %v511
        %v513 = vsel %vm507, %v512, %v511
        %vm514 = vcmp.ne.s32.totalorder %v513, 0
        %vm515 = vcmp.lt.s32.totalorder %v513, 0
        %vm516 = vmand %vm515, %vm514
        %v517 = vadd.s32 %v513, 4
        %v518 = vsel %vm516, %v517, %v513
        %vm519 = vcmp.eq.s32.totalorder %v499, %v518
        %vm520 = vcmp.eq.s32.totalorder %v500, %v518
        %vm521 = vcmp.eq.s32.totalorder %v501, %v518
        %vm522 = vcmp.eq.s32.totalorder %v502, %v518
        %vm523 = vcmp.eq.s32.totalorder %v503, %v518
        %vm524 = vcmp.eq.s32.totalorder %v504, %v518
        %vm525 = vcmp.eq.s32.totalorder %v505, %v518
        %vm526 = vcmp.eq.s32.totalorder %v506, %v518
        %vm527 = vmand %vm403, %vm519
        %vm528 = vmand %vm404, %vm520
        %vm529 = vmand %vm405, %vm521
        %vm530 = vmand %vm406, %vm522
        %vm531 = vmand %vm407, %vm523
        %vm532 = vmand %vm408, %vm524
        %vm533 = vmand %vm409, %vm525
        %vm534 = vmand %vm410, %vm526
        %v535 = vsel %vm403, %v360, -1e+30
        %v536 = vsel %vm404, %v361, -1e+30
        %v537 = vsel %vm405, %v362, -1e+30
        %v538 = vsel %vm406, %v363, -1e+30
        %v539 = vsel %vm407, %v364, -1e+30
        %v540 = vsel %vm408, %v365, -1e+30
        %v541 = vsel %vm409, %v366, -1e+30
        %v542 = vsel %vm410, %v367, -1e+30
        %v543 = vld [vmem:[#allocation2] sm:$0xff]
        %v544 = vld [vmem:[#allocation2 + $0x8] sm:$0xff]
        %v545 = vld [vmem:[#allocation2 + $0x10] sm:$0xff]
        %v546 = vld [vmem:[#allocation2 + $0x18] sm:$0xff]
        %v547 = vld [vmem:[#allocation2 + $0x20] sm:$0xff]
        %v548 = vld [vmem:[#allocation2 + $0x28] sm:$0xff]
        %v549 = vld [vmem:[#allocation2 + $0x30] sm:$0xff]
        %v550 = vld [vmem:[#allocation2 + $0x38] sm:$0xff]
        %551 = vmax.xlane.f32.xlu0 %v535
        %v552 = vpop.xlane.xlu0 %551
        %553 = vmax.xlane.f32.xlu0 %v536
        %v554 = vpop.xlane.xlu0 %553
        %555 = vmax.xlane.f32.xlu0 %v537
        %v556 = vpop.xlane.xlu0 %555
        %557 = vmax.xlane.f32.xlu0 %v538
        %v558 = vpop.xlane.xlu0 %557
        %559 = vmax.xlane.f32.xlu0 %v539
        %v560 = vpop.xlane.xlu0 %559
        %561 = vmax.xlane.f32.xlu0 %v540
        %v562 = vpop.xlane.xlu0 %561
        %563 = vmax.xlane.f32.xlu0 %v541
        %v564 = vpop.xlane.xlu0 %563
        %565 = vmax.xlane.f32.xlu0 %v542
        %v566 = vpop.xlane.xlu0 %565
        %v567 = vmax.f32 %v543, %v552
        %v568 = vmax.f32 %v544, %v554
        %v569 = vmax.f32 %v545, %v556
        %v570 = vmax.f32 %v546, %v558
        %v571 = vmax.f32 %v547, %v560
        %v572 = vmax.f32 %v548, %v562
        %v573 = vmax.f32 %v549, %v564
        %v574 = vmax.f32 %v550, %v566
        %v575 = vsub.f32 %v543, %v567
        %v576 = vsub.f32 %v544, %v568
        %v577 = vsub.f32 %v545, %v569
        %v578 = vsub.f32 %v546, %v570
        %v579 = vsub.f32 %v547, %v571
        %v580 = vsub.f32 %v548, %v572
        %v581 = vsub.f32 %v549, %v573
        %v582 = vsub.f32 %v550, %v574
        %v583 = vmul.f32 %v575, 1.442695
        %v584 = vpow.pop %v583
        %v585 = vmul.f32 %v576, 1.442695
        %v586 = vpow.pop %v585
        %v587 = vmul.f32 %v577, 1.442695
        %v588 = vpow.pop %v587
        %v589 = vmul.f32 %v578, 1.442695
        %v590 = vpow.pop %v589
        %v591 = vmul.f32 %v579, 1.442695
        %v592 = vpow.pop %v591
        %v593 = vmul.f32 %v580, 1.442695
        %v594 = vpow.pop %v593
        %v595 = vmul.f32 %v581, 1.442695
        %v596 = vpow.pop %v595
        %v597 = vmul.f32 %v582, 1.442695
        %v598 = vpow.pop %v597
        %600 = vset.pattern.permute.xlu0 0
        %601 = vperm.xlu0 %600, %v567
        %v602 = vpop.permute.xlu0 %601
        %605 = vset.pattern.permute.xlu0 0
        %606 = vperm.xlu0 %605, %v568
        %v607 = vpop.permute.xlu0 %606
        %610 = vset.pattern.permute.xlu0 0
        %611 = vperm.xlu0 %610, %v569
        %v612 = vpop.permute.xlu0 %611
        %615 = vset.pattern.permute.xlu0 0
        %616 = vperm.xlu0 %615, %v570
        %v617 = vpop.permute.xlu0 %616
        %620 = vset.pattern.permute.xlu0 0
        %621 = vperm.xlu0 %620, %v571
        %v622 = vpop.permute.xlu0 %621
        %625 = vset.pattern.permute.xlu0 0
        %626 = vperm.xlu0 %625, %v572
        %v627 = vpop.permute.xlu0 %626
        %630 = vset.pattern.permute.xlu0 0
        %631 = vperm.xlu0 %630, %v573
        %v632 = vpop.permute.xlu0 %631
        %635 = vset.pattern.permute.xlu0 0
        %636 = vperm.xlu0 %635, %v574
        %v637 = vpop.permute.xlu0 %636
        %v639 = vsub.f32 %v535, %v602
        %v640 = vsub.f32 %v536, %v607
        %v641 = vsub.f32 %v537, %v612
        %v642 = vsub.f32 %v538, %v617
        %v643 = vsub.f32 %v539, %v622
        %v644 = vsub.f32 %v540, %v627
        %v645 = vsub.f32 %v541, %v632
        %v646 = vsub.f32 %v542, %v637
        %v647 = vmul.f32 %v639, 1.442695
        %v648 = vpow.pop %v647
        %v649 = vmul.f32 %v640, 1.442695
        %v650 = vpow.pop %v649
        %v651 = vmul.f32 %v641, 1.442695
        %v652 = vpow.pop %v651
        %v653 = vmul.f32 %v642, 1.442695
        %v654 = vpow.pop %v653
        %v655 = vmul.f32 %v643, 1.442695
        %v656 = vpow.pop %v655
        %v657 = vmul.f32 %v644, 1.442695
        %v658 = vpow.pop %v657
        %v659 = vmul.f32 %v645, 1.442695
        %v660 = vpow.pop %v659
        %v661 = vmul.f32 %v646, 1.442695
        %v662 = vpow.pop %v661
        %v663 = vld [vmem:[#allocation3] sm:$0xff]
        %v664 = vld [vmem:[#allocation3 + $0x8] sm:$0xff]
        %v665 = vld [vmem:[#allocation3 + $0x10] sm:$0xff]
        %v666 = vld [vmem:[#allocation3 + $0x18] sm:$0xff]
        %v667 = vld [vmem:[#allocation3 + $0x20] sm:$0xff]
        %v668 = vld [vmem:[#allocation3 + $0x28] sm:$0xff]
        %v669 = vld [vmem:[#allocation3 + $0x30] sm:$0xff]
        %v670 = vld [vmem:[#allocation3 + $0x38] sm:$0xff]
        %v671 = vmul.f32 %v584, %v663
        %v672 = vmul.f32 %v586, %v664
        %v673 = vmul.f32 %v588, %v665
        %v674 = vmul.f32 %v590, %v666
        %v675 = vmul.f32 %v592, %v667
        %v676 = vmul.f32 %v594, %v668
        %v677 = vmul.f32 %v596, %v669
        %v678 = vmul.f32 %v598, %v670
        %679 = vadd.xlane.f32.xlu0 %v648
        %v680 = vpop.xlane.xlu0 %679
        %681 = vadd.xlane.f32.xlu0 %v650
        %v682 = vpop.xlane.xlu0 %681
        %683 = vadd.xlane.f32.xlu0 %v652
        %v684 = vpop.xlane.xlu0 %683
        %685 = vadd.xlane.f32.xlu0 %v654
        %v686 = vpop.xlane.xlu0 %685
        %687 = vadd.xlane.f32.xlu0 %v656
        %v688 = vpop.xlane.xlu0 %687
        %689 = vadd.xlane.f32.xlu0 %v658
        %v690 = vpop.xlane.xlu0 %689
        %691 = vadd.xlane.f32.xlu0 %v660
        %v692 = vpop.xlane.xlu0 %691
        %693 = vadd.xlane.f32.xlu0 %v662
        %v694 = vpop.xlane.xlu0 %693
        %v695 = vadd.f32 %v671, %v680
        %v696 = vadd.f32 %v672, %v682
        %v697 = vadd.f32 %v673, %v684
        %v698 = vadd.f32 %v674, %v686
        %v699 = vadd.f32 %v675, %v688
        %v700 = vadd.f32 %v676, %v690
        %v701 = vadd.f32 %v677, %v692
        %v702 = vadd.f32 %v678, %v694
        %vm703 = vcmask 7168
        %704 = vst.msk [vmem:[#allocation3] sm:$0xff] %vm703, %v695
        %705 = vst.msk [vmem:[#allocation3 + $0x8] sm:$0xff] %vm703, %v696
        %706 = vst.msk [vmem:[#allocation3 + $0x10] sm:$0xff] %vm703, %v697
        %707 = vst.msk [vmem:[#allocation3 + $0x18] sm:$0xff] %vm703, %v698
        %708 = vst.msk [vmem:[#allocation3 + $0x20] sm:$0xff] %vm703, %v699
        %709 = vst.msk [vmem:[#allocation3 + $0x28] sm:$0xff] %vm703, %v700
        %710 = vst.msk [vmem:[#allocation3 + $0x30] sm:$0xff] %vm703, %v701
        %711 = vst.msk [vmem:[#allocation3 + $0x38] sm:$0xff] %vm703, %v702
        %v712 = vld [vmem:[#allocation4] sm:$0xff]
        %v713 = vld [vmem:[#allocation4 + $0x8] sm:$0xff]
        %v714 = vld [vmem:[#allocation4 + $0x10] sm:$0xff]
        %v715 = vld [vmem:[#allocation4 + $0x18] sm:$0xff]
        %v716 = vld [vmem:[#allocation4 + $0x20] sm:$0xff]
        %v717 = vld [vmem:[#allocation4 + $0x28] sm:$0xff]
        %v718 = vld [vmem:[#allocation4 + $0x30] sm:$0xff]
        %v719 = vld [vmem:[#allocation4 + $0x38] sm:$0xff]
        %v720 = vsel %vm527, %v360, 0.0
        %v721 = vsel %vm528, %v361, 0.0
        %v722 = vsel %vm529, %v362, 0.0
        %v723 = vsel %vm530, %v363, 0.0
        %v724 = vsel %vm531, %v364, 0.0
        %v725 = vsel %vm532, %v365, 0.0
        %v726 = vsel %vm533, %v366, 0.0
        %v727 = vsel %vm534, %v367, 0.0
        %728 = vadd.xlane.f32.xlu0 %v720
        %v729 = vpop.xlane.xlu0 %728
        %730 = vadd.xlane.f32.xlu0 %v721
        %v731 = vpop.xlane.xlu0 %730
        %732 = vadd.xlane.f32.xlu0 %v722
        %v733 = vpop.xlane.xlu0 %732
        %734 = vadd.xlane.f32.xlu0 %v723
        %v735 = vpop.xlane.xlu0 %734
        %736 = vadd.xlane.f32.xlu0 %v724
        %v737 = vpop.xlane.xlu0 %736
        %738 = vadd.xlane.f32.xlu0 %v725
        %v739 = vpop.xlane.xlu0 %738
        %740 = vadd.xlane.f32.xlu0 %v726
        %v741 = vpop.xlane.xlu0 %740
        %742 = vadd.xlane.f32.xlu0 %v727
        %v743 = vpop.xlane.xlu0 %742
        %v744 = vadd.f32 %v712, %v729
        %v745 = vadd.f32 %v713, %v731
        %v746 = vadd.f32 %v714, %v733
        %v747 = vadd.f32 %v715, %v735
        %v748 = vadd.f32 %v716, %v737
        %v749 = vadd.f32 %v717, %v739
        %v750 = vadd.f32 %v718, %v741
        %v751 = vadd.f32 %v719, %v743
        %752 = vst.msk [vmem:[#allocation4] sm:$0xff] %vm703, %v744
        %753 = vst.msk [vmem:[#allocation4 + $0x8] sm:$0xff] %vm703, %v745
        %754 = vst.msk [vmem:[#allocation4 + $0x10] sm:$0xff] %vm703, %v746
        %755 = vst.msk [vmem:[#allocation4 + $0x18] sm:$0xff] %vm703, %v747
        %756 = vst.msk [vmem:[#allocation4 + $0x20] sm:$0xff] %vm703, %v748
        %757 = vst.msk [vmem:[#allocation4 + $0x28] sm:$0xff] %vm703, %v749
        %758 = vst.msk [vmem:[#allocation4 + $0x30] sm:$0xff] %vm703, %v750
        %759 = vst.msk [vmem:[#allocation4 + $0x38] sm:$0xff] %vm703, %v751
        %760 = vst.msk [vmem:[#allocation2] sm:$0xff] %vm703, %v567
        %761 = vst.msk [vmem:[#allocation2 + $0x8] sm:$0xff] %vm703, %v568
        %762 = vst.msk [vmem:[#allocation2 + $0x10] sm:$0xff] %vm703, %v569
        %763 = vst.msk [vmem:[#allocation2 + $0x18] sm:$0xff] %vm703, %v570
        %764 = vst.msk [vmem:[#allocation2 + $0x20] sm:$0xff] %vm703, %v571
        %765 = vst.msk [vmem:[#allocation2 + $0x28] sm:$0xff] %vm703, %v572
        %766 = vst.msk [vmem:[#allocation2 + $0x30] sm:$0xff] %vm703, %v573
        %767 = vst.msk [vmem:[#allocation2 + $0x38] sm:$0xff] %vm703, %v574
        // Predicated region
        $region41: #{tpu_custom_call.1} parent=27 // pred_check
          %p768 = pneg %p202
        $region42: #{tpu_custom_call.1} parent=27 // pred_check_branch
          %770 = sbr.rel (%p768) target = $region44
        $region43: #{tpu_custom_call.1} parent=27 // pred_region
          %v771 = vld [vmem:[#allocation2] sm:$0xff]
          %v772 = vld [vmem:[#allocation2 + $0x8] sm:$0xff]
          %v773 = vld [vmem:[#allocation2 + $0x10] sm:$0xff]
          %v774 = vld [vmem:[#allocation2 + $0x18] sm:$0xff]
          %v775 = vld [vmem:[#allocation2 + $0x20] sm:$0xff]
          %v776 = vld [vmem:[#allocation2 + $0x28] sm:$0xff]
          %v777 = vld [vmem:[#allocation2 + $0x30] sm:$0xff]
          %v778 = vld [vmem:[#allocation2 + $0x38] sm:$0xff]
          %v779 = vld [vmem:[#allocation3] sm:$0xff]
          %v780 = vld [vmem:[#allocation3 + $0x8] sm:$0xff]
          %v781 = vld [vmem:[#allocation3 + $0x10] sm:$0xff]
          %v782 = vld [vmem:[#allocation3 + $0x18] sm:$0xff]
          %v783 = vld [vmem:[#allocation3 + $0x20] sm:$0xff]
          %v784 = vld [vmem:[#allocation3 + $0x28] sm:$0xff]
          %v785 = vld [vmem:[#allocation3 + $0x30] sm:$0xff]
          %v786 = vld [vmem:[#allocation3 + $0x38] sm:$0xff]
          %v787 = vlog2.pop %v779
          %v788 = vmul.f32 %v787, 0.6931472
          %v789 = vlog2.pop %v780
          %v790 = vmul.f32 %v789, 0.6931472
          %v791 = vlog2.pop %v781
          %v792 = vmul.f32 %v791, 0.6931472
          %v793 = vlog2.pop %v782
          %v794 = vmul.f32 %v793, 0.6931472
          %v795 = vlog2.pop %v783
          %v796 = vmul.f32 %v795, 0.6931472
          %v797 = vlog2.pop %v784
          %v798 = vmul.f32 %v797, 0.6931472
          %v799 = vlog2.pop %v785
          %v800 = vmul.f32 %v799, 0.6931472
          %v801 = vlog2.pop %v786
          %v802 = vmul.f32 %v801, 0.6931472
          %v803 = vadd.f32 %v771, %v788
          %v804 = vadd.f32 %v772, %v790
          %v805 = vadd.f32 %v773, %v792
          %v806 = vadd.f32 %v774, %v794
          %v807 = vadd.f32 %v775, %v796
          %v808 = vadd.f32 %v776, %v798
          %v809 = vadd.f32 %v777, %v800
          %v810 = vadd.f32 %v778, %v802
          %v811 = vld [vmem:[#allocation4] sm:$0xff]
          %v812 = vld [vmem:[#allocation4 + $0x8] sm:$0xff]
          %v813 = vld [vmem:[#allocation4 + $0x10] sm:$0xff]
          %v814 = vld [vmem:[#allocation4 + $0x18] sm:$0xff]
          %v815 = vld [vmem:[#allocation4 + $0x20] sm:$0xff]
          %v816 = vld [vmem:[#allocation4 + $0x28] sm:$0xff]
          %v817 = vld [vmem:[#allocation4 + $0x30] sm:$0xff]
          %v818 = vld [vmem:[#allocation4 + $0x38] sm:$0xff]
          %v819 = vsub.f32 %v811, %v803
          %v820 = vsub.f32 %v812, %v804
          %v821 = vsub.f32 %v813, %v805
          %v822 = vsub.f32 %v814, %v806
          %v823 = vsub.f32 %v815, %v807
          %v824 = vsub.f32 %v816, %v808
          %v825 = vsub.f32 %v817, %v809
          %v826 = vsub.f32 %v818, %v810
          %v827 = vmul.f32 %v819, -1.0
          %v828 = vmul.f32 %v820, -1.0
          %v829 = vmul.f32 %v821, -1.0
          %v830 = vmul.f32 %v822, -1.0
          %v831 = vmul.f32 %v823, -1.0
          %v832 = vmul.f32 %v824, -1.0
          %v833 = vmul.f32 %v825, -1.0
          %v834 = vmul.f32 %v826, -1.0
          %vm835 = vcmp.lt.s32.totalorder %v379, 8
          %vm836 = vcmp.lt.s32.totalorder %v380, 8
          %vm837 = vcmp.lt.s32.totalorder %v381, 8
          %vm838 = vcmp.lt.s32.totalorder %v382, 8
          %vm839 = vcmp.lt.s32.totalorder %v383, 8
          %vm840 = vcmp.lt.s32.totalorder %v384, 8
          %vm841 = vcmp.lt.s32.totalorder %v385, 8
          %vm842 = vcmp.lt.s32.totalorder %v386, 8
          %v843 = vsel %vm835, %v827, 0.0
          %v844 = vsel %vm836, %v828, 0.0
          %v845 = vsel %vm837, %v829, 0.0
          %v846 = vsel %vm838, %v830, 0.0
          %v847 = vsel %vm839, %v831, 0.0
          %v848 = vsel %vm840, %v832, 0.0
          %v849 = vsel %vm841, %v833, 0.0
          %v850 = vsel %vm842, %v834, 0.0
          %851 = vst.msk [vmem:[%s200] sm:$0xff] %vm703, %v843
          %852 = vst.msk [vmem:[%s200 + $0x8] sm:$0xff] %vm703, %v844
          %853 = vst.msk [vmem:[%s200 + $0x10] sm:$0xff] %vm703, %v845
          %854 = vst.msk [vmem:[%s200 + $0x18] sm:$0xff] %vm703, %v846
          %855 = vst.msk [vmem:[%s200 + $0x20] sm:$0xff] %vm703, %v847
          %856 = vst.msk [vmem:[%s200 + $0x28] sm:$0xff] %vm703, %v848
          %857 = vst.msk [vmem:[%s200 + $0x30] sm:$0xff] %vm703, %v849
          %858 = vst.msk [vmem:[%s200 + $0x38] sm:$0xff] %vm703, %v850
        $region44: #{tpu_custom_call.1} parent=27 // pred_fallthru
          _
        %s859 = smul.u32 8, %s21
        %p860 = scmp.lt.s32.totalorder %s859, 15
        %s861 = scalar_select %p860, %s859, 15
        %s862 = smul.addr %s861, 8
        %s863 = scalar_lea.vmem %s2, %s862
        // Predicated region
        $region45: #{tpu_custom_call.1} parent=27 // pred_check
          %p864 = pneg %p99
        $region46: #{tpu_custom_call.1} parent=27 // pred_check_branch
          %866 = sbr.rel (%p864) target = $region48
        $region47: #{tpu_custom_call.1} parent=27 // pred_region
          %s867 = smul.u32 8, %s21
        $region48: #{tpu_custom_call.1} parent=27 // pred_fallthru
          _
      $region28: #{tpu_custom_call.1} parent=5 // pred_fallthru
        _
      %p868 = scmp.le.s32.totalorder 2, %s12
      // Predicated region
      $region49: #{tpu_custom_call.1} parent=5 // pred_check
        %p869 = pneg %p868
      $region50: #{tpu_custom_call.1} parent=5 // pred_check_branch
        %871 = sbr.rel (%p869) target = $region52
      $region51: #{tpu_custom_call.1} parent=5 // pred_region
        %s872 = ssub.s32 %s12, 2
        // Predicated region
        $region53: #{tpu_custom_call.1} parent=51 // pred_check
          %p873 = pneg %p105
        $region54: #{tpu_custom_call.1} parent=51 // pred_check_branch
          %875 = sbr.rel (%p873) target = $region56
        $region55: #{tpu_custom_call.1} parent=51 // pred_region
          %s876 = smul.u32 8, %s23
          %p877 = scmp.lt.s32.totalorder %s876, 15
          %s878 = scalar_select %p877, %s876, 15
          %s879 = smul.addr %s878, 8
          %s880 = scalar_lea.vmem %s2, %s879
        $region56: #{tpu_custom_call.1} parent=51 // pred_fallthru
          _
      $region52: #{tpu_custom_call.1} parent=5 // pred_fallthru
        _
    $region6: #{tpu_custom_call.1} parent=1 // loop_footer
      %s16 = sadd.s32 1, %s12
    $region7: #{tpu_custom_call.1} parent=1 // loop_footer_branch
      %11 = sbr.rel target = $region3
    $region8: #{tpu_custom_call.1} parent=1 // loop_exit
      _
    %881 = vsyncpa [#allocation6], 1
    %s882 = scalar_lea.sflag [#allocation6], 1
    %883 = vsyncpa %s882, 1
    %884 = vsyncpa [#allocation8], 1

</llo_original>
